<compile_context>
chip_gen: v5e
topology: v5e:2x2
jax: 0.10.0
libtpu: 0.0.40
codegen_flags: <defaults>
</compile_context>

<pallas_src>
import jax
import jax.numpy as jnp
from jax import lax
from jax.experimental import pallas as pl
from jax.experimental.pallas import tpu as pltpu

BN_EPS = 1e-5


def _round_up(x, m):
    return ((x + m - 1) // m) * m


def _dense_bn_relu_kernel(x_ref, w_ref, gamma_ref, beta_ref, o_ref, acc_ref):
    # grid = (out_tiles, k_tiles); the K (reduction) axis is last.
    k = pl.program_id(1)

    @pl.when(k == 0)
    def _():
        acc_ref[...] = jnp.zeros_like(acc_ref)

    # MXU matmul on the current (N, TILE_K) x (TILE_K, TILE_OUT) slab; f32 accumulate.
    acc_ref[...] += jnp.dot(x_ref[...], w_ref[...],
                            preferred_element_type=jnp.float32)

    @pl.when(k == pl.num_programs(1) - 1)
    def _():
        y = acc_ref[...]
        # BatchNorm1d training-mode forward: biased batch statistics over axis 0.
        # (Two-pass form kept for fp32 parity with PyTorch.)
        mean = jnp.mean(y, axis=0, keepdims=True)
        centered = y - mean
        var = jnp.mean(centered * centered, axis=0, keepdims=True)
        # Fold gamma into the rsqrt scale: single (N, TILE_OUT) multiply.
        scale = gamma_ref[...] * lax.rsqrt(var + BN_EPS)
        out = centered * scale + beta_ref[...]
        o_ref[...] = jnp.maximum(out, 0.0).astype(o_ref.dtype)


def dense_l_b_forward(x, w, b, gamma, beta, *, tile_out=256, tile_k=512,
                      matmul_dtype=None):
    """Dense_L_b forward.

    x:     (N, in_size)
    w:     (out_size, in_size)  -- PyTorch nn.Linear weight layout
    b:     (out_size,)          -- nn.Linear bias; a per-feature constant is exactly
                                   cancelled by train-mode BN's mean subtraction, so
                                   it is accepted for interface fidelity but unused.
    gamma: (out_size,)          -- BatchNorm1d weight
    beta:  (out_size,)          -- BatchNorm1d bias

    tile_out / tile_k: tune per generation (rule of thumb: halve the v6e choice on
    v7x, which has 64 MiB VMEM per TensorCore).
    """
    del b  # exactly cancelled by BatchNorm's batch-mean subtraction (train mode)
    n, in_size = x.shape
    out_size = w.shape[0]

    # Lane-dense, 128-multiple tiles; clamp tiles to the (padded) problem size.
    tile_out = min(tile_out, _round_up(out_size, 128))
    tile_k = min(tile_k, _round_up(in_size, 128))
    out_p = _round_up(out_size, tile_out)
    in_p = _round_up(in_size, tile_k)

    mm_dtype = matmul_dtype or x.dtype
    x_p = jnp.zeros((n, in_p), mm_dtype).at[:, :in_size].set(x.astype(mm_dtype))
    w_t = jnp.zeros((in_p, out_p), mm_dtype).at[:in_size, :out_size].set(
        w.T.astype(mm_dtype))
    gamma_p = jnp.zeros((1, out_p), jnp.float32).at[0, :out_size].set(
        gamma.astype(jnp.float32))
    beta_p = jnp.zeros((1, out_p), jnp.float32).at[0, :out_size].set(
        beta.astype(jnp.float32))

    grid = (out_p // tile_out, in_p // tile_k)

    out = pl.pallas_call(
        _dense_bn_relu_kernel,
        out_shape=jax.ShapeDtypeStruct((n, out_p), jnp.float32),
        grid_spec=pltpu.PrefetchScalarGridSpec(
            num_scalar_prefetch=0,
            grid=grid,
            in_specs=[
                pl.BlockSpec((n, tile_k), lambda j, k: (0, k)),          # x slab
                pl.BlockSpec((tile_k, tile_out), lambda j, k: (k, j)),   # weight slab
                pl.BlockSpec((1, tile_out), lambda j, k: (0, j)),        # gamma
                pl.BlockSpec((1, tile_out), lambda j, k: (0, j)),        # beta
            ],
            out_specs=pl.BlockSpec((n, tile_out), lambda j, k: (0, j)),
            scratch_shapes=[pltpu.VMEM((n, tile_out), jnp.float32)],     # accumulator
        ),
        compiler_params=pltpu.CompilerParams(
            dimension_semantics=("parallel", "arbitrary"),
        ),
    )(x_p, w_t, gamma_p, beta_p)

    return out[:, :out_size]


if __name__ == "__main__":
    # Small shapes chosen to exercise both grid axes and the padding path:
    # Out 160 -> padded 256 (2 tiles of 128), In 192 -> padded 256 (2 K-steps of 128).
    batch, in_size, out_size = 8, 192, 160

    key = jax.random.PRNGKey(0)
    kx, kw, kb = jax.random.split(key, 3)

    bound = 1.0 / (in_size ** 0.5)
    x = jax.random.normal(kx, (batch, in_size), dtype=jnp.float32)
    w = jax.random.uniform(kw, (out_size, in_size), jnp.float32, -bound, bound)
    b = jax.random.uniform(kb, (out_size,), jnp.float32, -bound, bound)
    gamma = jnp.ones((out_size,), jnp.float32)   # BN weight init = 1
    beta = jnp.zeros((out_size,), jnp.float32)   # BN bias   init = 0

    out = dense_l_b_forward(x, w, b, gamma, beta, tile_out=128, tile_k=128)
    jax.block_until_ready(out)

    # Pure-JAX reference (train-mode BN with biased batch variance, eps=1e-5).
    y_ref = x @ w.T + b
    mu = jnp.mean(y_ref, axis=0, keepdims=True)
    var = jnp.mean((y_ref - mu) ** 2, axis=0, keepdims=True)
    ref = jnp.maximum(gamma * (y_ref - mu) / jnp.sqrt(var + BN_EPS) + beta, 0.0)
    assert jnp.allclose(out, ref, atol=1e-4, rtol=1e-4), float(
        jnp.max(jnp.abs(out - ref)))

    print("KERNEL_OK")
</pallas_src>

<mosaic_0001>
module attributes {stable_mosaic.version = 11 : i64} {
  func.func @_dense_bn_relu_kernel(%arg0: i32, %arg1: i32, %arg2: memref<8x128xf32, #tpu.memory_space<vmem>>, %arg3: memref<128x128xf32, #tpu.memory_space<vmem>>, %arg4: memref<1x128xf32, #tpu.memory_space<vmem>>, %arg5: memref<1x128xf32, #tpu.memory_space<vmem>>, %arg6: memref<8x128xf32, #tpu.memory_space<vmem>>, %arg7: memref<8x128xf32, #tpu.memory_space<vmem>>) attributes {dimension_semantics = [#tpu.dimension_semantics<parallel>, #tpu.dimension_semantics<arbitrary>], iteration_bounds = array<i64: 2, 2>, scalar_prefetch = 0 : i64, scratch_operands = 1 : i64, tpu.core_type = #tpu.core_type<tc>, window_params = [{transform_indices = @transform_0, window_bounds = array<i64: 8, 128>}, {transform_indices = @transform_1, window_bounds = array<i64: 128, 128>}, {transform_indices = @transform_2, window_bounds = array<i64: 1, 128>}, {transform_indices = @transform_3, window_bounds = array<i64: 1, 128>}, {transform_indices = @transform_4, window_bounds = array<i64: 8, 128>}]} {
    %c0_i32 = arith.constant 0 : i32
    %0 = arith.cmpi eq, %arg1, %c0_i32 : i32
    %1 = arith.extui %0 : i1 to i32
    %c0_i32_0 = arith.constant 0 : i32
    %2 = arith.cmpi ne, %1, %c0_i32_0 : i32
    scf.if %2 {
      %cst_9 = arith.constant 0.000000e+00 : f32
      %12 = vector.broadcast %cst_9 : f32 to vector<8x128xf32>
      %c0_10 = arith.constant 0 : index
      %c0_11 = arith.constant 0 : index
      %13 = vector.load %arg7[%c0_10, %c0_11] : memref<8x128xf32, #tpu.memory_space<vmem>>, vector<8x128xf32>
      tpu.vector_store %arg7[%c0_10, %c0_11], %12 {strides = array<i32>} : memref<8x128xf32, #tpu.memory_space<vmem>>, vector<8x128xf32>,
    } else {
    }
    %c0 = arith.constant 0 : index
    %c0_1 = arith.constant 0 : index
    %3 = vector.load %arg7[%c0, %c0_1] : memref<8x128xf32, #tpu.memory_space<vmem>>, vector<8x128xf32>
    %c0_2 = arith.constant 0 : index
    %c0_3 = arith.constant 0 : index
    %4 = vector.load %arg2[%c0_2, %c0_3] : memref<8x128xf32, #tpu.memory_space<vmem>>, vector<8x128xf32>
    %c0_4 = arith.constant 0 : index
    %c0_5 = arith.constant 0 : index
    %5 = vector.load %arg3[%c0_4, %c0_5] : memref<128x128xf32, #tpu.memory_space<vmem>>, vector<128x128xf32>
    %cst = arith.constant dense<0.000000e+00> : vector<8x128xf32>
    %6 = tpu.matmul %4, %5, %cst {dimension_numbers = #tpu.dot_dimension_numbers<[1], [0], [0], [1], [0, 0, 1, 1], [], []>} : vector<8x128xf32>, vector<128x128xf32>, vector<8x128xf32> -> vector<8x128xf32>
    %7 = arith.addf %3, %6 : vector<8x128xf32>
    %c0_6 = arith.constant 0 : index
    %c0_7 = arith.constant 0 : index
    %8 = vector.load %arg7[%c0_6, %c0_7] : memref<8x128xf32, #tpu.memory_space<vmem>>, vector<8x128xf32>
    tpu.vector_store %arg7[%c0_6, %c0_7], %7 {strides = array<i32>} : memref<8x128xf32, #tpu.memory_space<vmem>>, vector<8x128xf32>,
    %c1_i32 = arith.constant 1 : i32
    %9 = arith.cmpi eq, %arg1, %c1_i32 : i32
    %10 = arith.extui %9 : i1 to i32
    %c0_i32_8 = arith.constant 0 : i32
    %11 = arith.cmpi ne, %10, %c0_i32_8 : i32
    scf.if %11 {
      %c0_9 = arith.constant 0 : index
      %c0_10 = arith.constant 0 : index
      %12 = vector.load %arg7[%c0_9, %c0_10] : memref<8x128xf32, #tpu.memory_space<vmem>>, vector<8x128xf32>
      %cst_11 = arith.constant dense<0.000000e+00> : vector<128xf32>
      %13 = vector.multi_reduction <add>, %12, %cst_11 [0] : vector<8x128xf32> to vector<128xf32>
      %14 = vector.shape_cast %13 : vector<128xf32> to vector<1x128xf32>
      %cst_12 = arith.constant 8.000000e+00 : f32
      %15 = vector.broadcast %cst_12 : f32 to vector<1x128xf32>
      %16 = arith.divf %14, %15 : vector<1x128xf32>
      %17 = vector.broadcast %16 : vector<1x128xf32> to vector<8x128xf32>
      %18 = arith.subf %12, %17 : vector<8x128xf32>
      %19 = arith.mulf %18, %18 : vector<8x128xf32>
      %cst_13 = arith.constant dense<0.000000e+00> : vector<128xf32>
      %20 = vector.multi_reduction <add>, %19, %cst_13 [0] : vector<8x128xf32> to vector<128xf32>
      %21 = vector.shape_cast %20 : vector<128xf32> to vector<1x128xf32>
      %cst_14 = arith.constant 8.000000e+00 : f32
      %22 = vector.broadcast %cst_14 : f32 to vector<1x128xf32>
      %23 = arith.divf %21, %22 : vector<1x128xf32>
      %c0_15 = arith.constant 0 : index
      %c0_16 = arith.constant 0 : index
      %24 = vector.load %arg4[%c0_15, %c0_16] : memref<1x128xf32, #tpu.memory_space<vmem>>, vector<1x128xf32>
      %cst_17 = arith.constant 9.99999974E-6 : f32
      %25 = vector.broadcast %cst_17 : f32 to vector<1x128xf32>
      %26 = arith.addf %23, %25 : vector<1x128xf32>
      %27 = math.rsqrt %26 : vector<1x128xf32>
      %28 = arith.mulf %24, %27 : vector<1x128xf32>
      %29 = vector.broadcast %28 : vector<1x128xf32> to vector<8x128xf32>
      %30 = arith.mulf %18, %29 : vector<8x128xf32>
      %c0_18 = arith.constant 0 : index
      %c0_19 = arith.constant 0 : index
      %31 = vector.load %arg5[%c0_18, %c0_19] : memref<1x128xf32, #tpu.memory_space<vmem>>, vector<1x128xf32>
      %32 = vector.broadcast %31 : vector<1x128xf32> to vector<8x128xf32>
      %33 = arith.addf %30, %32 : vector<8x128xf32>
      %cst_20 = arith.constant 0.000000e+00 : f32
      %34 = vector.broadcast %cst_20 : f32 to vector<8x128xf32>
      %35 = arith.maximumf %33, %34 : vector<8x128xf32>
      %c0_21 = arith.constant 0 : index
      %c0_22 = arith.constant 0 : index
      %36 = vector.load %arg6[%c0_21, %c0_22] : memref<8x128xf32, #tpu.memory_space<vmem>>, vector<8x128xf32>
      tpu.vector_store %arg6[%c0_21, %c0_22], %35 {strides = array<i32>} : memref<8x128xf32, #tpu.memory_space<vmem>>, vector<8x128xf32>,
    } else {
    }
    return
  }
  func.func @transform_0(%arg0: i32, %arg1: i32) -> (i32, i32) {
    %c0_i32 = arith.constant 0 : i32
    %c0_i32_0 = arith.constant 0 : i32
    return %c0_i32, %arg1 : i32, i32
  }
  func.func @transform_1(%arg0: i32, %arg1: i32) -> (i32, i32) {
    %c0_i32 = arith.constant 0 : i32
    return %arg1, %arg0 : i32, i32
  }
  func.func @transform_2(%arg0: i32, %arg1: i32) -> (i32, i32) {
    %c0_i32 = arith.constant 0 : i32
    %c0_i32_0 = arith.constant 0 : i32
    return %c0_i32, %arg0 : i32, i32
  }
  func.func @transform_3(%arg0: i32, %arg1: i32) -> (i32, i32) {
    %c0_i32 = arith.constant 0 : i32
    %c0_i32_0 = arith.constant 0 : i32
    return %c0_i32, %arg0 : i32, i32
  }
  func.func @transform_4(%arg0: i32, %arg1: i32) -> (i32, i32) {
    %c0_i32 = arith.constant 0 : i32
    %c0_i32_0 = arith.constant 0 : i32
    return %c0_i32, %arg0 : i32, i32
  }
}

</mosaic_0001>

<llo_original>
// kernel: tpu_custom_call.1
$region0: #{tpu_custom_call.1}
  #allocation0 [shape = 'u32[]', space=smem, size = 0x4, offset = 0x4, fixed_abs, tag = 'smem constant byte address 0x4 - core index']
  #allocation1 [shape = 'u32[72,128]{1,0:T(1,128)}', space=vmem, size = 0x9000, scoped, tag = 'internal scratch']
  #allocation2 [shape = 'f32[8,128]{1,0:T(8,128)}', space=vmem, size = 0x1000, scoped, tag = 'scratch operand']
  %s0 = inlined_call_operand.hbm [shape: f32[8,256], index: 0, kind: input, shape index: {}]
  %s1 = inlined_call_operand.hbm [shape: f32[256,256], index: 1, kind: input, shape index: {}]
  %s2 = inlined_call_operand.hbm [shape: f32[1,256], index: 2, kind: input, shape index: {}]
  %s3 = inlined_call_operand.vmem [shape: f32[1,256], index: 3, kind: input, shape index: {}]
  %s4 = inlined_call_operand.hbm [shape: f32[8,256], index: 4, kind: output, shape index: {}]
  %s5 = sld [smem:[#allocation0]]
  $region69: #{tpu_custom_call.1} parent=0
    _
  %s7 = ssub.s32 1, %s5
  %s8 = scalar_select 0, %s7, %s5
  $region1: #{tpu_custom_call.1} parent=0
    #allocation3 [shape = 'u8[8192]{0}', space=vmem, size = 0x2000, scoped, tag = 'input window, operand 0']
    #allocation4 [shape = 's32[2]{0}', space=sflag, size = 0x8, scoped, tag = 'scoped memory for tpu_custom_call.1']
    #allocation5 [shape = 's32[2]{0}', space=sflag, size = 0x8, scoped, tag = 'scoped memory for tpu_custom_call.1']
    #allocation6 [shape = 'u8[131072]{0}', space=vmem, size = 0x20000, scoped, tag = 'input window, operand 1']
    #allocation7 [shape = 's32[2]{0}', space=sflag, size = 0x8, scoped, tag = 'scoped memory for tpu_custom_call.1']
    #allocation8 [shape = 'u8[1024]{0}', space=vmem, size = 0x400, scoped, tag = 'input window, operand 2']
    #allocation9 [shape = 'u8[8192]{0}', space=vmem, size = 0x2000, scoped, tag = 'output window, operand 0']
    %9 = vsyncpa [#allocation4], 0
    %s10 = scalar_lea.sflag [#allocation4], 1
    %11 = vsyncpa %s10, 0
    %12 = vsyncpa [#allocation7], 0
    %s13 = scalar_lea.sflag [#allocation7], 1
    %14 = vsyncpa %s13, 0
    %15 = vsyncpa [#allocation5], 0
    %s16 = scalar_lea.sflag [#allocation5], 1
    %17 = vsyncpa %s16, 0
    loop: start=0, step=1, limit=6
    $region2: #{tpu_custom_call.1} parent=1 // loop_pre_header
      _
    $region3: #{tpu_custom_call.1} parent=1 // loop_header
      %s19 = sphi 0, %s23
      %p20 = scmp.ge.s32.totalorder %s19, 6
      %s26 = sphi 0, %s38
      %s27 = sphi 0, %s34
      %s28 = sphi 0, %s26
      %s29 = sphi 0, %s27
      %s30 = sphi 0, %s28
      %s31 = sphi 0, %s29
      %s41 = sphi 0, %s43
      %s44 = sphi 0, %s41
      %s45 = sphi 0, %s44
      %s61 = sphi 0, %s45
      %s69 = sphi 0, %s71
      %s72 = sphi 0, %s69
      %s73 = sphi 0, %s72
      %s89 = sphi 0, %s73
      %s95 = sphi 0, %s97
      %s98 = sphi 0, %s95
      %s99 = sphi 0, %s98
      %s115 = sphi 0, %s99
      %s121 = sphi 0, %s123
      %s124 = sphi 0, %s121
      %s125 = sphi 0, %s124
      %s141 = sphi 0, %s125
      %s147 = sphi 0, %s149
      %s150 = sphi 0, %s147
      %s151 = sphi 0, %s150
      %s167 = sphi 0, %s151
    $region4: #{tpu_custom_call.1} parent=1 // loop_header_branch
      %22 = sbr.rel (%p20) target = $region8
    $region5: #{tpu_custom_call.1} parent=1 // loop_body
      %s24 = ssub.s32 %s19, 1
      %s25 = ssub.s32 %s19, 2
      %s32 = sadd.s32 1, %s27
      %p33 = scmp.ge.s32.totalorder %s32, 2
      %s34 = scalar_select %p33, 0, %s32
      %s35 = sadd.s32 1, %s26
      %s36 = scalar_select %p33, %s35, %s26
      %p37 = scmp.ge.s32.totalorder %s36, 2
      %s38 = scalar_select %p37, 0, %s36
      %s39 = ssub.s32 %s27, %s34
      %p40 = scmp.eq.s32.totalorder %s39, 0
      %s42 = sadd.s32 %s41, 1
      %s43 = scalar_select %p40, %s41, %s42
      %p46 = pneg %p40
      %p47 = scmp.eq.s32.totalorder %s19, 3
      %p48 = por %p46, %p47
      %p49 = scmp.ne.s32.totalorder %s41, %s44
      %p50 = scmp.eq.s32.totalorder %s19, 0
      %p51 = por %p49, %p50
      %p52 = scmp.ne.s32.totalorder %s41, %s44
      %p53 = scmp.eq.s32.totalorder %s24, 3
      %p54 = por %p52, %p53
      %p55 = scmp.ne.s32.totalorder %s44, %s45
      %p56 = scmp.eq.s32.totalorder %s24, 0
      %p57 = por %p55, %p56
      %p58 = scmp.ne.s32.totalorder %s44, %s45
      %p59 = scmp.eq.s32.totalorder %s25, 3
      %p60 = por %p58, %p59
      %p62 = scmp.ne.s32.totalorder %s45, %s61
      %p63 = scmp.eq.s32.totalorder %s25, 0
      %p64 = por %p62, %p63
      %s65 = ssub.s32 %s27, %s34
      %s66 = ssub.s32 %s26, %s38
      %s67 = sor.u32 %s65, %s66
      %p68 = scmp.eq.s32.totalorder %s67, 0
      %s70 = sadd.s32 %s69, 1
      %s71 = scalar_select %p68, %s69, %s70
      %p74 = pneg %p68
      %p75 = scmp.eq.s32.totalorder %s19, 3
      %p76 = por %p74, %p75
      %p77 = scmp.ne.s32.totalorder %s69, %s72
      %p78 = scmp.eq.s32.totalorder %s19, 0
      %p79 = por %p77, %p78
      %p80 = scmp.ne.s32.totalorder %s69, %s72
      %p81 = scmp.eq.s32.totalorder %s24, 3
      %p82 = por %p80, %p81
      %p83 = scmp.ne.s32.totalorder %s72, %s73
      %p84 = scmp.eq.s32.totalorder %s24, 0
      %p85 = por %p83, %p84
      %p86 = scmp.ne.s32.totalorder %s72, %s73
      %p87 = scmp.eq.s32.totalorder %s25, 3
      %p88 = por %p86, %p87
      %p90 = scmp.ne.s32.totalorder %s73, %s89
      %p91 = scmp.eq.s32.totalorder %s25, 0
      %p92 = por %p90, %p91
      %s93 = ssub.s32 %s26, %s38
      %p94 = scmp.eq.s32.totalorder %s93, 0
      %s96 = sadd.s32 %s95, 1
      %s97 = scalar_select %p94, %s95, %s96
      %p100 = pneg %p94
      %p101 = scmp.eq.s32.totalorder %s19, 3
      %p102 = por %p100, %p101
      %p103 = scmp.ne.s32.totalorder %s95, %s98
      %p104 = scmp.eq.s32.totalorder %s19, 0
      %p105 = por %p103, %p104
      %p106 = scmp.ne.s32.totalorder %s95, %s98
      %p107 = scmp.eq.s32.totalorder %s24, 3
      %p108 = por %p106, %p107
      %p109 = scmp.ne.s32.totalorder %s98, %s99
      %p110 = scmp.eq.s32.totalorder %s24, 0
      %p111 = por %p109, %p110
      %p112 = scmp.ne.s32.totalorder %s98, %s99
      %p113 = scmp.eq.s32.totalorder %s25, 3
      %p114 = por %p112, %p113
      %p116 = scmp.ne.s32.totalorder %s99, %s115
      %p117 = scmp.eq.s32.totalorder %s25, 0
      %p118 = por %p116, %p117
      %s119 = ssub.s32 %s26, %s38
      %p120 = scmp.eq.s32.totalorder %s119, 0
      %s122 = sadd.s32 %s121, 1
      %s123 = scalar_select %p120, %s121, %s122
      %p126 = pneg %p120
      %p127 = scmp.eq.s32.totalorder %s19, 3
      %p128 = por %p126, %p127
      %p129 = scmp.ne.s32.totalorder %s121, %s124
      %p130 = scmp.eq.s32.totalorder %s19, 0
      %p131 = por %p129, %p130
      %p132 = scmp.ne.s32.totalorder %s121, %s124
      %p133 = scmp.eq.s32.totalorder %s24, 3
      %p134 = por %p132, %p133
      %p135 = scmp.ne.s32.totalorder %s124, %s125
      %p136 = scmp.eq.s32.totalorder %s24, 0
      %p137 = por %p135, %p136
      %p138 = scmp.ne.s32.totalorder %s124, %s125
      %p139 = scmp.eq.s32.totalorder %s25, 3
      %p140 = por %p138, %p139
      %p142 = scmp.ne.s32.totalorder %s125, %s141
      %p143 = scmp.eq.s32.totalorder %s25, 0
      %p144 = por %p142, %p143
      %s145 = ssub.s32 %s26, %s38
      %p146 = scmp.eq.s32.totalorder %s145, 0
      %s148 = sadd.s32 %s147, 1
      %s149 = scalar_select %p146, %s147, %s148
      %p152 = pneg %p146
      %p153 = scmp.eq.s32.totalorder %s19, 3
      %p154 = por %p152, %p153
      %p155 = scmp.ne.s32.totalorder %s147, %s150
      %p156 = scmp.eq.s32.totalorder %s19, 0
      %p157 = por %p155, %p156
      %p158 = scmp.ne.s32.totalorder %s147, %s150
      %p159 = scmp.eq.s32.totalorder %s24, 3
      %p160 = por %p158, %p159
      %p161 = scmp.ne.s32.totalorder %s150, %s151
      %p162 = scmp.eq.s32.totalorder %s24, 0
      %p163 = por %p161, %p162
      %p164 = scmp.ne.s32.totalorder %s150, %s151
      %p165 = scmp.eq.s32.totalorder %s25, 3
      %p166 = por %p164, %p165
      %p168 = scmp.ne.s32.totalorder %s151, %s167
      %p169 = scmp.eq.s32.totalorder %s25, 0
      %p170 = por %p168, %p169
      %p171 = scmp.le.s32.totalorder 1, %s19
      %p172 = scmp.lt.s32.totalorder %s19, 5
      %p173 = pnand %p171, %p172
      %p174 = pneg %p173
      // Predicated region
      $region9: #{tpu_custom_call.1} parent=5 // pred_check
        _
      $region10: #{tpu_custom_call.1} parent=5 // pred_check_branch
        %176 = sbr.rel (%p173) target = $region12
      $region11: #{tpu_custom_call.1} parent=5 // pred_region
        %s177 = ssub.s32 %s19, 1
      $region12: #{tpu_custom_call.1} parent=5 // pred_fallthru
        _
      %p178 = scmp.lt.s32.totalorder %s19, 4
      // Predicated region
      $region13: #{tpu_custom_call.1} parent=5 // pred_check
        %p179 = pneg %p178
      $region14: #{tpu_custom_call.1} parent=5 // pred_check_branch
        %181 = sbr.rel (%p179) target = $region16
      $region15: #{tpu_custom_call.1} parent=5 // pred_region
        // Predicated region
        $region17: #{tpu_custom_call.1} parent=15 // pred_check
          %p182 = pneg %p51
        $region18: #{tpu_custom_call.1} parent=15 // pred_check_branch
          %184 = sbr.rel (%p182) target = $region20
        $region19: #{tpu_custom_call.1} parent=15 // pred_region
          %s185 = sand.u32 %s41, 1
          %s186 = scalar_lea.sflag [#allocation4], %s185
          %s187 = sand.u32 %s41, 1
          %s188 = smul.addr %s187, 8
          %s189 = scalar_lea.vmem [#allocation3], %s188
          %191 = vsyncadd %s186, 0
          %s192 = smul.addr %s27, 8
          %s193 = scalar_lea.hbm %s0, %s192
          %s195 = sshll.u32 %s193, 4
          %s196 = int_to_ptr.hbm [resolvable:$true] %s195
          %s197 = sshll.u32 %s189, 4
          %s198 = int_to_ptr.vmem [resolvable:$true] %s197
          %200 = dma.hbm_to_vmem [thread:$0]  %s196, 128, %s198, %s186
        $region20: #{tpu_custom_call.1} parent=15 // pred_fallthru
          _
        // Predicated region
        $region21: #{tpu_custom_call.1} parent=15 // pred_check
          %p201 = pneg %p79
        $region22: #{tpu_custom_call.1} parent=15 // pred_check_branch
          %203 = sbr.rel (%p201) target = $region24
        $region23: #{tpu_custom_call.1} parent=15 // pred_region
          %s204 = sand.u32 %s19, 1
          %s205 = scalar_lea.sflag [#allocation7], %s204
          %s206 = sand.u32 %s69, 1
          %s207 = smul.addr %s206, 128
          %s208 = scalar_lea.vmem [#allocation6], %s207
          %s209 = smul.u32 16, %s27
          %211 = vsyncadd %s205, 0
          %s212 = smul.addr %s209, 2
          %s213 = sadd.s32 %s26, %s212
          %s214 = smul.addr %s213, 8
          %s215 = scalar_lea.hbm %s1, %s214
          %s216 = sshll.u32 %s215, 4
          %s217 = int_to_ptr.hbm [resolvable:$true] %s216
          %s218 = sshll.u32 %s208, 4
          %s219 = int_to_ptr.vmem [resolvable:$true] %s218
          %224 = dma.hbm_to_vmem [thread:$0]  %s217, 2048, %s219, %s205, 256, 128, 8
        $region24: #{tpu_custom_call.1} parent=15 // pred_fallthru
          _
        // Predicated region
        $region25: #{tpu_custom_call.1} parent=15 // pred_check
          %p225 = pneg %p105
        $region26: #{tpu_custom_call.1} parent=15 // pred_check_branch
          %227 = sbr.rel (%p225) target = $region28
        $region27: #{tpu_custom_call.1} parent=15 // pred_region
          %s228 = sand.u32 %s19, 1
          %s229 = scalar_lea.sflag [#allocation7], %s228
          %s230 = sand.u32 %s95, 1
          %s231 = scalar_lea.vmem [#allocation8], %s230
          %233 = vsyncadd %s229, 0
          %s234 = scalar_lea.hbm %s2, %s26
          %s236 = sshll.u32 %s234, 4
          %s237 = int_to_ptr.hbm [resolvable:$true] %s236
          %s238 = sshll.u32 %s231, 4
          %s239 = int_to_ptr.vmem [resolvable:$true] %s238
          %241 = dma.hbm_to_vmem [thread:$0]  %s237, 16, %s239, %s229
        $region28: #{tpu_custom_call.1} parent=15 // pred_fallthru
          _
        // Predicated region
        $region29: #{tpu_custom_call.1} parent=15 // pred_check
          %p242 = pneg %p131
        $region30: #{tpu_custom_call.1} parent=15 // pred_check_branch
          %244 = sbr.rel (%p242) target = $region32
        $region31: #{tpu_custom_call.1} parent=15 // pred_region
          %p245 = scmp.lt.s32.totalorder %s26, 1
          %s246 = scalar_select %p245, %s26, 1
          %s247 = scalar_lea.vmem %s3, %s246
        $region32: #{tpu_custom_call.1} parent=15 // pred_fallthru
          _
      $region16: #{tpu_custom_call.1} parent=5 // pred_fallthru
        _
      %p248 = scmp.le.s32.totalorder 1, %s19
      %p249 = scmp.lt.s32.totalorder %s19, 5
      %p250 = pnand %p248, %p249
      %p251 = pneg %p250
      // Predicated region
      $region33: #{tpu_custom_call.1} parent=5 // pred_check
        _
      $region34: #{tpu_custom_call.1} parent=5 // pred_check_branch
        %253 = sbr.rel (%p250) target = $region36
      $region35: #{tpu_custom_call.1} parent=5 // pred_region
        %s254 = ssub.s32 %s19, 1
        %s255 = sand.u32 %s44, 1
        %s256 = scalar_lea.sflag [#allocation4], %s255
        %s257 = sand.u32 %s44, 1
        %s258 = smul.addr %s257, 8
        %s259 = scalar_lea.vmem [#allocation3], %s258
        // Predicated region
        $region37: #{tpu_custom_call.1} parent=35 // pred_check
          %p260 = pneg %p57
        $region38: #{tpu_custom_call.1} parent=35 // pred_check_branch
          %262 = sbr.rel (%p260) target = $region40
        $region39: #{tpu_custom_call.1} parent=35 // pred_region
          %264 = dma.done %s256, 128
        $region40: #{tpu_custom_call.1} parent=35 // pred_fallthru
          _
        %s265 = sand.u32 %s24, 1
        %s266 = scalar_lea.sflag [#allocation7], %s265
        %s267 = sand.u32 %s72, 1
        %s268 = smul.addr %s267, 128
        %s269 = scalar_lea.vmem [#allocation6], %s268
        // Predicated region
        $region41: #{tpu_custom_call.1} parent=35 // pred_check
          %p270 = pneg %p85
        $region42: #{tpu_custom_call.1} parent=35 // pred_check_branch
          %272 = sbr.rel (%p270) target = $region44
        $region43: #{tpu_custom_call.1} parent=35 // pred_region
          %274 = dma.done %s266, 2048
        $region44: #{tpu_custom_call.1} parent=35 // pred_fallthru
          _
        %s275 = sand.u32 %s24, 1
        %s276 = scalar_lea.sflag [#allocation7], %s275
        %s277 = sand.u32 %s98, 1
        %s278 = scalar_lea.vmem [#allocation8], %s277
        // Predicated region
        $region45: #{tpu_custom_call.1} parent=35 // pred_check
          %p279 = pneg %p111
        $region46: #{tpu_custom_call.1} parent=35 // pred_check_branch
          %281 = sbr.rel (%p279) target = $region48
        $region47: #{tpu_custom_call.1} parent=35 // pred_region
          %283 = dma.done %s276, 16
        $region48: #{tpu_custom_call.1} parent=35 // pred_fallthru
          _
        %s284 = sand.u32 %s44, 1
        %s285 = scalar_lea.sflag [#allocation4], %s284
        %s286 = sand.u32 %s44, 1
        %s287 = smul.addr %s286, 8
        %s288 = scalar_lea.vmem [#allocation3], %s287
        %p289 = pneg %p57
        %p290 = pneg %p54
        %s291 = sand.u32 %s24, 1
        %s292 = scalar_lea.sflag [#allocation7], %s291
        %s293 = sand.u32 %s72, 1
        %s294 = smul.addr %s293, 128
        %s295 = scalar_lea.vmem [#allocation6], %s294
        %p296 = pneg %p85
        %p297 = pneg %p82
        %s298 = sand.u32 %s24, 1
        %s299 = scalar_lea.sflag [#allocation7], %s298
        %s300 = sand.u32 %s98, 1
        %s301 = scalar_lea.vmem [#allocation8], %s300
        %p302 = pneg %p111
        %p303 = pneg %p108
        %p304 = scmp.lt.s32.totalorder %s28, 1
        %s305 = scalar_select %p304, %s28, 1
        %s306 = scalar_lea.vmem %s3, %s305
        %p307 = pneg %p137
        %p308 = pneg %p134
        %p309 = pneg %p163
        %p310 = pneg %p160
        %s311 = sand.u32 %s150, 1
        %s312 = scalar_lea.sflag [#allocation5], %s311
        %s313 = sand.u32 %s150, 1
        %s314 = smul.addr %s313, 8
        %s315 = scalar_lea.vmem [#allocation9], %s314
        %s316 = smul.u32 16, %s29
        %p317 = scmp.lt.s32.totalorder %s28, 1
        %s318 = scalar_select %p317, %s28, 1
        %s319 = scalar_lea.vmem %s3, %s318
        %p320 = scmp.eq.s32.totalorder %s29, 0
        // Predicated region
        $region49: #{tpu_custom_call.1} parent=35 // pred_check
          %p321 = pneg %p320
        $region50: #{tpu_custom_call.1} parent=35 // pred_check_branch
          %323 = sbr.rel (%p321) target = $region52
        $region51: #{tpu_custom_call.1} parent=35 // pred_region
          %324 = vst [vmem:[#allocation2] sm:$0xff] 0.0
        $region52: #{tpu_custom_call.1} parent=35 // pred_fallthru
          _
        %v325 = vld [vmem:[#allocation2] sm:$0xff]
        %v326 = vld [vmem:[%s259] sm:$0xff]
        %v327 = vld [vmem:[%s269] sm:$0xff]
        %v328 = vld [vmem:[%s269 + $0x8] sm:$0xff]
        %v329 = vld [vmem:[%s269 + $0x10] sm:$0xff]
        %v330 = vld [vmem:[%s269 + $0x18] sm:$0xff]
        %v331 = vld [vmem:[%s269 + $0x20] sm:$0xff]
        %v332 = vld [vmem:[%s269 + $0x28] sm:$0xff]
        %v333 = vld [vmem:[%s269 + $0x30] sm:$0xff]
        %v334 = vld [vmem:[%s269 + $0x38] sm:$0xff]
        %v335 = vld [vmem:[%s269 + $0x40] sm:$0xff]
        %v336 = vld [vmem:[%s269 + $0x48] sm:$0xff]
        %v337 = vld [vmem:[%s269 + $0x50] sm:$0xff]
        %v338 = vld [vmem:[%s269 + $0x58] sm:$0xff]
        %v339 = vld [vmem:[%s269 + $0x60] sm:$0xff]
        %v340 = vld [vmem:[%s269 + $0x68] sm:$0xff]
        %v341 = vld [vmem:[%s269 + $0x70] sm:$0xff]
        %v342 = vld [vmem:[%s269 + $0x78] sm:$0xff]
        %343 = vmatpush.msra.mxu0 %v342
        %344 = vmatpush.msra.mxu0 %v341
        %345 = vmatpush.msra.mxu0 %v340
        %346 = vmatpush.msra.mxu0 %v339
        %347 = vmatpush.msra.mxu0 %v338
        %348 = vmatpush.msra.mxu0 %v337
        %349 = vmatpush.msra.mxu0 %v336
        %350 = vmatpush.msra.mxu0 %v335
        %351 = vmatpush.msra.mxu0 %v334
        %352 = vmatpush.msra.mxu0 %v333
        %353 = vmatpush.msra.mxu0 %v332
        %354 = vmatpush.msra.mxu0 %v331
        %355 = vmatpush.msra.mxu0 %v330
        %356 = vmatpush.msra.mxu0 %v329
        %357 = vmatpush.msra.mxu0 %v328
        %358 = vmatpush.msra.mxu0 %v327
        %359 = vmatmul.f32.gmra.mxu0 %v326
        %v360 = vpop.f32.mrf.mxu0
        %v361 = vadd.f32 0.0, %v360
        %362 = vdwg.mxu0
        %v363 = vadd.f32 %v325, %v361
        %364 = vst [vmem:[#allocation2] sm:$0xff] %v363
        %p365 = scmp.eq.s32.totalorder %s29, 1
        // Predicated region
        $region53: #{tpu_custom_call.1} parent=35 // pred_check
          %p366 = pneg %p365
        $region54: #{tpu_custom_call.1} parent=35 // pred_check_branch
          %368 = sbr.rel (%p366) target = $region56
        $region55: #{tpu_custom_call.1} parent=35 // pred_region
          %v369 = vld [vmem:[#allocation2] sm:$0xff]
          %v370 = vrot.slane %v369, 4
          %v371 = vadd.f32 %v369, %v370
          %v372 = vrot.slane %v371, 2
          %v373 = vadd.f32 %v371, %v372
          %v374 = vrot.slane %v373, 1
          %v375 = vadd.f32 %v373, %v374
          %v376 = vrcp.pop 8.0
          %v377 = vmul.f32 8.0, %v376
          %v378 = vsub.f32 1.0, %v377
          %v379 = vmul.f32 %v376, %v378
          %v380 = vadd.f32 %v376, %v379
          %vm381 = vweird.f32 %v376
          %v382 = vsel %vm381, %v376, %v380
          %v383 = vmul.f32 %v375, %v382
          %v384 = vsub.f32 %v369, %v383
          %v385 = vmul.f32 %v384, %v384
          %v386 = vrot.slane %v385, 4
          %v387 = vadd.f32 %v385, %v386
          %v388 = vrot.slane %v387, 2
          %v389 = vadd.f32 %v387, %v388
          %v390 = vrot.slane %v389, 1
          %v391 = vadd.f32 %v389, %v390
          %v392 = vmul.f32 %v391, %v382
          %v393 = vld [vmem:[%s278] sm:$0x1]
          %v394 = vadd.f32 %v392, 1e-05
          %v395 = vrsqrt.pop %v394
          %v396 = vmul.f32 %v395, %v394
          %v397 = vmul.f32 %v396, %v395
          %v398 = vmul.f32 0.5, %v397
          %v399 = vsub.f32 1.5, %v398
          %v400 = vmul.f32 %v395, %v399
          %vm401 = vweird.f32 %v394
          %vm402 = vweird.f32 %v395
          %vm403 = vmor %vm401, %vm402
          %v404 = vsel %vm403, %v395, %v400
          %v405 = vmul.f32 %v393, %v404
          %v407 = vperm.slane %v405, 0
          %v409 = vmul.f32 %v384, %v407
          %v410 = vld [vmem:[%s319] sm:$0x1]
          %v412 = vperm.slane %v410, 0
          %v414 = vadd.f32 %v409, %v412
          %v415 = vmax.f32 %v414, 0.0
          %416 = vst [vmem:[%s315] sm:$0xff] %v415
        $region56: #{tpu_custom_call.1} parent=35 // pred_fallthru
          _
        %s417 = sand.u32 %s150, 1
        %s418 = scalar_lea.sflag [#allocation5], %s417
        %s419 = sand.u32 %s150, 1
        %s420 = smul.addr %s419, 8
        %s421 = scalar_lea.vmem [#allocation9], %s420
        // Predicated region
        $region57: #{tpu_custom_call.1} parent=35 // pred_check
          %p422 = pneg %p160
        $region58: #{tpu_custom_call.1} parent=35 // pred_check_branch
          %424 = sbr.rel (%p422) target = $region60
        $region59: #{tpu_custom_call.1} parent=35 // pred_region
          %426 = vsyncadd %s418, 0
          %s427 = smul.addr %s28, 8
          %s428 = scalar_lea.hbm %s4, %s427
          %s430 = sshll.u32 %s421, 4
          %s431 = int_to_ptr.vmem [resolvable:$true] %s430
          %s432 = sshll.u32 %s428, 4
          %s433 = int_to_ptr.hbm [resolvable:$true] %s432
          %435 = dma.vmem_to_hbm [thread:$0]  %s431, 128, %s433, %s418
        $region60: #{tpu_custom_call.1} parent=35 // pred_fallthru
          _
      $region36: #{tpu_custom_call.1} parent=5 // pred_fallthru
        _
      %p436 = scmp.le.s32.totalorder 2, %s19
      // Predicated region
      $region61: #{tpu_custom_call.1} parent=5 // pred_check
        %p437 = pneg %p436
      $region62: #{tpu_custom_call.1} parent=5 // pred_check_branch
        %439 = sbr.rel (%p437) target = $region64
      $region63: #{tpu_custom_call.1} parent=5 // pred_region
        %s440 = ssub.s32 %s19, 2
        // Predicated region
        $region65: #{tpu_custom_call.1} parent=63 // pred_check
          %p441 = pneg %p166
        $region66: #{tpu_custom_call.1} parent=63 // pred_check_branch
          %443 = sbr.rel (%p441) target = $region68
        $region67: #{tpu_custom_call.1} parent=63 // pred_region
          %s444 = sand.u32 %s151, 1
          %s445 = scalar_lea.sflag [#allocation5], %s444
          %s446 = sand.u32 %s151, 1
          %s447 = smul.addr %s446, 8
          %s448 = scalar_lea.vmem [#allocation9], %s447
          %450 = dma.done %s445, 128
        $region68: #{tpu_custom_call.1} parent=63 // pred_fallthru
          _
      $region64: #{tpu_custom_call.1} parent=5 // pred_fallthru
        _
    $region6: #{tpu_custom_call.1} parent=1 // loop_footer
      %s23 = sadd.s32 1, %s19
    $region7: #{tpu_custom_call.1} parent=1 // loop_footer_branch
      %18 = sbr.rel target = $region3
    $region8: #{tpu_custom_call.1} parent=1 // loop_exit
      _
    %451 = vsyncpa [#allocation4], 1
    %s452 = scalar_lea.sflag [#allocation4], 1
    %453 = vsyncpa %s452, 1
    %454 = vsyncpa [#allocation7], 1
    %s455 = scalar_lea.sflag [#allocation7], 1
    %456 = vsyncpa %s455, 1
    %457 = vsyncpa [#allocation5], 1
    %s458 = scalar_lea.sflag [#allocation5], 1
    %459 = vsyncpa %s458, 1

</llo_original>
